<compile_context>
chip_gen: v6e
topology: v6e:2x2x1
jax: 0.10.0
libtpu: 0.0.40
codegen_flags: <defaults>
</compile_context>

<pallas_src>
import functools

import jax
import jax.numpy as jnp
from jax.experimental import pallas as pl
from jax.experimental.pallas import tpu as pltpu

LANES = 128
SUBLANES = 8
INNER_ROWS = 512          # rows per in-kernel chunk (bounds live f32 temporaries)
LN2 = 0.6931471805599453


def _combined_loss_kernel(p_ref, t_ref, o_ref, acc_ref, mx_ref, *,
                          block_rows, inner_rows, n_inner, rows_arr,
                          steps_per_core, may_mask):
    """Per-core partial reduction.

    acc_ref: VMEM f32[6, 8, 128] per-lane partial sums:
       0: sum(sigmoid(p)*t)   1: sum(sigmoid(p))
       2: sum(p*t)            3: sum(p)
       4: sum(t)              5: sum(relu(p) + log1p(exp(-|p|)))   (bce + p*t)
    mx_ref: VMEM f32[8, 128] running per-lane max(p).
    o_ref : (1, 7, 8, 128) per-core partials written on the last arbitrary step.
    """
    c = pl.program_id(0)
    i = pl.program_id(1)

    @pl.when(i == 0)
    def _():
        acc_ref[...] = jnp.zeros_like(acc_ref)
        mx_ref[...] = jnp.full_like(mx_ref, -jnp.inf)

    g = c * steps_per_core + i            # global (unclamped) block index
    r_in = inner_rows // SUBLANES

    def part(x):
        return jnp.sum(x.reshape(r_in, SUBLANES, LANES), axis=0)

    @pl.loop(0, n_inner)
    def _(j):
        row0 = pl.multiple_of(j * inner_rows, inner_rows)
        p = p_ref[pl.ds(row0, inner_rows), :].astype(jnp.float32)
        t = t_ref[pl.ds(row0, inner_rows), :].astype(jnp.float32)

        if may_mask:
            # Only chunks touching the valid-row boundary (or fully beyond it,
            # e.g. duplicated/clamped blocks) pay for the mask; undefined rows
            # are sanitized to exact zeros and corrected analytically later.
            chunk_base = g * block_rows + j * inner_rows

            def _masked(args):
                p_, t_ = args
                ri = jax.lax.broadcasted_iota(jnp.int32, (inner_rows, LANES), 0)
                valid = (chunk_base + ri) < rows_arr
                return (jnp.where(valid, p_, 0.0),
                        jnp.where(valid, t_, 0.0),
                        jnp.where(valid, p_, -jnp.inf))

            def _clean(args):
                p_, t_ = args
                return p_, t_, p_

            p, t, p_mx = jax.lax.cond(chunk_base + inner_rows > rows_arr,
                                      _masked, _clean, (p, t))
        else:
            p_mx = p

        # Shared transcendental: one exp(-|p|) feeds both sigmoid and softplus.
        e = jnp.exp(-jnp.abs(p))
        inv = pl.reciprocal(1.0 + e, approx=True)     # EUP, no VPU refinement
        sig = jnp.where(p >= 0, inv, e * inv)
        # BCE elementwise is relu(p) - p*t + log1p(e); the p*t term is folded
        # into the already-needed sum(p*t) and reassociated at finalize.
        sp = jnp.maximum(p, 0.0) + jnp.log1p(e)

        acc_ref[0] += part(sig * t)
        acc_ref[1] += part(sig)
        acc_ref[2] += part(p * t)
        acc_ref[3] += part(p)
        acc_ref[4] += part(t)
        acc_ref[5] += part(sp)
        mx_ref[...] = jnp.maximum(
            mx_ref[...], jnp.max(p_mx.reshape(r_in, SUBLANES, LANES), axis=0))

    @pl.when(i == pl.num_programs(1) - 1)
    def _():
        o_ref[0, 0:6] = acc_ref[...]
        o_ref[0, 6] = mx_ref[...]


def combined_loss(predictions, targets, *, dice_weight=0.5, bce_weight=0.5,
                  smooth=1e-6, max_block_rows=8192, num_cores=2):
    n = int(predictions.size)
    p_flat = predictions.reshape(-1)
    t_flat = targets.reshape(-1)

    # Minimal padding: only to the next 128-lane multiple (and at least one
    # (8,128) tile), so the (rows,128) reshape is a free view for common sizes.
    min_elems = SUBLANES * LANES
    padded = max(pl.cdiv(n, LANES) * LANES, min_elems)
    if padded != n:
        p_flat = jnp.pad(p_flat, (0, padded - n))
        t_flat = jnp.pad(t_flat, (0, padded - n))
    rows_arr = padded // LANES
    p2 = p_flat.reshape(rows_arr, LANES)
    t2 = t_flat.reshape(rows_arr, LANES)

    # Tile selection: big DMA blocks (multiples of INNER_ROWS when possible);
    # the kernel streams each block through INNER_ROWS-row chunks.
    rows8 = (rows_arr // SUBLANES) * SUBLANES
    max_block_rows = max(INNER_ROWS, (max_block_rows // INNER_ROWS) * INNER_ROWS)
    if rows8 >= INNER_ROWS:
        block_rows = min(max_block_rows, (rows8 // INNER_ROWS) * INNER_ROWS)
    else:
        block_rows = rows8
    inner_rows = min(INNER_ROWS, block_rows)
    n_inner = block_rows // inner_rows

    steps_total = pl.cdiv(rows_arr, block_rows)
    n_cores = max(1, min(num_cores, steps_total))   # dual-TC split (v7x)
    steps_per_core = pl.cdiv(steps_total, n_cores)
    grid_blocks = n_cores * steps_per_core
    needs_clamp = grid_blocks > steps_total
    may_mask = grid_blocks * block_rows > rows_arr
    # Elements beyond n are either jnp.pad zeros or masked-to-zero in-kernel;
    # each contributes exactly 0.5 to sum(sigmoid) and ln2 to the softplus sum.
    total_pad = grid_blocks * block_rows * LANES - n

    def in_map(c, i):
        g = c * steps_per_core + i
        if needs_clamp:
            g = jnp.minimum(g, steps_total - 1)   # avoid fully-OOB block DMA
        return (g, 0)

    kernel = functools.partial(
        _combined_loss_kernel, block_rows=block_rows, inner_rows=inner_rows,
        n_inner=n_inner, rows_arr=rows_arr, steps_per_core=steps_per_core,
        may_mask=may_mask)

    in_bytes = block_rows * LANES * (p2.dtype.itemsize + t2.dtype.itemsize)
    vmem_limit = min(2 * in_bytes + (8 << 20), 64 << 20)

    parts = pl.pallas_call(
        kernel,
        out_shape=jax.ShapeDtypeStruct((n_cores, 7, SUBLANES, LANES),
                                       jnp.float32),
        grid_spec=pltpu.PrefetchScalarGridSpec(
            num_scalar_prefetch=0,
            grid=(n_cores, steps_per_core),
            in_specs=[pl.BlockSpec((block_rows, LANES), in_map),
                      pl.BlockSpec((block_rows, LANES), in_map)],
            out_specs=pl.BlockSpec((1, 7, SUBLANES, LANES),
                                   lambda c, i: (c, 0, 0, 0)),
            scratch_shapes=[pltpu.VMEM((6, SUBLANES, LANES), jnp.float32),
                            pltpu.VMEM((SUBLANES, LANES), jnp.float32)],
        ),
        compiler_params=pltpu.CompilerParams(
            dimension_semantics=("parallel", "arbitrary"),
            vmem_limit_bytes=vmem_limit),
    )(p2, t2)

    # Tiny scalar epilogue in XLA: cross-lane/core reduce, pad correction,
    # Dice/BCE combine.
    sums = jnp.sum(parts[:, :6], axis=(0, 2, 3))
    p_max = jnp.max(parts[:, 6])
    s_sig_t, s_sig, s_p_t, s_p, s_t, s_sp = (sums[k] for k in range(6))
    pad_f = jnp.float32(total_pad)
    s_sig = s_sig - 0.5 * pad_f                 # sigmoid(0) == 0.5 per pad elem
    s_sp = s_sp - jnp.float32(LN2) * pad_f      # softplus term == ln2 per pad elem
    s_bce = s_sp - s_p_t                        # bce = relu(p) + log1p(e) - p*t

    use_sig = p_max > 1.0                       # DiceLoss: sigmoid iff max(p) > 1
    inter = jnp.where(use_sig, s_sig_t, s_p_t)
    psum = jnp.where(use_sig, s_sig, s_p)
    dice = (2.0 * inter + smooth) / (psum + s_t + smooth)
    dice_loss = 1.0 - dice                      # reduction='mean'
    bce_loss = s_bce / jnp.float32(n)           # BCEWithLogitsLoss mean
    return (jnp.float32(dice_weight) * dice_loss +
            jnp.float32(bce_weight) * bce_loss)


def _reference(predictions, targets, dice_weight=0.5, bce_weight=0.5, smooth=1e-6):
    p = predictions.reshape(-1).astype(jnp.float32)
    t = targets.reshape(-1).astype(jnp.float32)
    pd = jnp.where(jnp.max(p) > 1, jax.nn.sigmoid(p), p)
    inter = jnp.sum(pd * t)
    dice = (2.0 * inter + smooth) / (jnp.sum(pd) + jnp.sum(t) + smooth)
    dice_loss = 1.0 - dice
    bce = jnp.mean(jnp.maximum(p, 0.0) - p * t + jnp.log1p(jnp.exp(-jnp.abs(p))))
    return dice_weight * dice_loss + bce_weight * bce


if __name__ == "__main__":
    key = jax.random.PRNGKey(0)
    k1, k2 = jax.random.split(key)
    # NCHW like the PyTorch module would receive: batch=2, channels=4, 16x16
    preds = jax.random.normal(k1, (2, 4, 16, 16), dtype=jnp.float32) * 2.0  # logits
    targs = (jax.random.uniform(k2, (2, 4, 16, 16)) > 0.5).astype(jnp.float32)

    loss = combined_loss(preds, targs)
    jax.block_until_ready(loss)

    ref = _reference(preds, targs)
    # pl.reciprocal(approx=True) introduces ~2^-12 relative error per sigmoid;
    # budget 5e-4 on the combined scalar loss.
    assert jnp.allclose(loss, ref, rtol=5e-4, atol=5e-4), (loss, ref)
    print("KERNEL_OK")
</pallas_src>

<mosaic_0001>
module attributes {stable_mosaic.version = 11 : i64} {
  func.func @_combined_loss_kernel(%arg0: i32, %arg1: i32, %arg2: memref<16x128xf32, #tpu.memory_space<vmem>>, %arg3: memref<16x128xf32, #tpu.memory_space<vmem>>, %arg4: memref<1x7x8x128xf32, #tpu.memory_space<vmem>>, %arg5: memref<6x8x128xf32, #tpu.memory_space<vmem>>, %arg6: memref<8x128xf32, #tpu.memory_space<vmem>>) attributes {dimension_semantics = [#tpu.dimension_semantics<parallel>, #tpu.dimension_semantics<arbitrary>], iteration_bounds = array<i64: 1, 1>, scalar_prefetch = 0 : i64, scratch_operands = 2 : i64, tpu.core_type = #tpu.core_type<tc>, window_params = [{transform_indices = @transform_0, window_bounds = array<i64: 16, 128>}, {transform_indices = @transform_1, window_bounds = array<i64: 16, 128>}, {transform_indices = @transform_2, window_bounds = array<i64: 1, 7, 8, 128>}]} {
    %c0_i32 = arith.constant 0 : i32
    %0 = arith.cmpi eq, %arg1, %c0_i32 : i32
    %1 = arith.extui %0 : i1 to i32
    %c0_i32_0 = arith.constant 0 : i32
    %2 = arith.cmpi ne, %1, %c0_i32_0 : i32
    scf.if %2 {
      %cst_52 = arith.constant 0.000000e+00 : f32
      %84 = vector.broadcast %cst_52 : f32 to vector<6x8x128xf32>
      %c0_53 = arith.constant 0 : index
      %c0_54 = arith.constant 0 : index
      %c0_55 = arith.constant 0 : index
      %85 = vector.load %arg5[%c0_53, %c0_54, %c0_55] : memref<6x8x128xf32, #tpu.memory_space<vmem>>, vector<6x8x128xf32>
      tpu.vector_store %arg5[%c0_53, %c0_54, %c0_55], %84 {strides = array<i32>} : memref<6x8x128xf32, #tpu.memory_space<vmem>>, vector<6x8x128xf32>,
      %cst_56 = arith.constant 0xFF800000 : f32
      %86 = vector.broadcast %cst_56 : f32 to vector<8x128xf32>
      %c0_57 = arith.constant 0 : index
      %c0_58 = arith.constant 0 : index
      %87 = vector.load %arg6[%c0_57, %c0_58] : memref<8x128xf32, #tpu.memory_space<vmem>>, vector<8x128xf32>
      tpu.vector_store %arg6[%c0_57, %c0_58], %86 {strides = array<i32>} : memref<8x128xf32, #tpu.memory_space<vmem>>, vector<8x128xf32>,
    } else {
    }
    %c0_i32_1 = arith.constant 0 : i32
    %c1_i32 = arith.constant 1 : i32
    %3 = arith.muli %c0_i32_1, %c1_i32 : i32
    %c0_i32_2 = arith.constant 0 : i32
    %4 = arith.addi %c0_i32_2, %3 : i32
    %c16_i32 = arith.constant 16 : i32
    %5 = arith.muli %4, %c16_i32 : i32
    %6 = tpu.assume_multiple %5, 16 : i32
    %7 = arith.index_cast %6 : i32 to index
    %c0 = arith.constant 0 : index
    %8 = vector.load %arg2[%7, %c0] : memref<16x128xf32, #tpu.memory_space<vmem>>, vector<16x128xf32>
    %9 = arith.index_cast %6 : i32 to index
    %c0_3 = arith.constant 0 : index
    %10 = vector.load %arg3[%9, %c0_3] : memref<16x128xf32, #tpu.memory_space<vmem>>, vector<16x128xf32>
    %11 = math.absf %8 : vector<16x128xf32>
    %cst = arith.constant 0.000000e+00 : f32
    %12 = vector.broadcast %cst : f32 to vector<16x128xf32>
    %13 = arith.subf %12, %11 : vector<16x128xf32>
    %14 = math.exp %13 : vector<16x128xf32>
    %cst_4 = arith.constant 1.000000e+00 : f32
    %15 = vector.broadcast %cst_4 : f32 to vector<16x128xf32>
    %16 = arith.addf %15, %14 : vector<16x128xf32>
    %17 = tpu.reciprocal %16 {approx = true} : vector<16x128xf32> -> vector<16x128xf32>
    %cst_5 = arith.constant 0.000000e+00 : f32
    %18 = vector.broadcast %cst_5 : f32 to vector<16x128xf32>
    %19 = arith.cmpf oge, %8, %18 : vector<16x128xf32>
    %20 = arith.mulf %14, %17 : vector<16x128xf32>
    %21 = arith.select %19, %17, %20 : vector<16x128xi1>, vector<16x128xf32>
    %cst_6 = arith.constant 0.000000e+00 : f32
    %22 = vector.broadcast %cst_6 : f32 to vector<16x128xf32>
    %23 = arith.maximumf %8, %22 : vector<16x128xf32>
    %24 = math.log1p %14 : vector<16x128xf32>
    %25 = arith.addf %23, %24 : vector<16x128xf32>
    %c0_7 = arith.constant 0 : index
    %c0_8 = arith.constant 0 : index
    %c0_9 = arith.constant 0 : index
    %26 = vector.load %arg5[%c0_7, %c0_8, %c0_9] : memref<6x8x128xf32, #tpu.memory_space<vmem>>, vector<1x8x128xf32>
    %27 = vector.shape_cast %26 : vector<1x8x128xf32> to vector<8x128xf32>
    %28 = arith.mulf %21, %10 : vector<16x128xf32>
    %29 = vector.shape_cast %28 : vector<16x128xf32> to vector<2x8x128xf32>
    %cst_10 = arith.constant dense<0.000000e+00> : vector<8x128xf32>
    %30 = vector.multi_reduction <add>, %29, %cst_10 [0] : vector<2x8x128xf32> to vector<8x128xf32>
    %31 = arith.addf %27, %30 : vector<8x128xf32>
    %c0_11 = arith.constant 0 : index
    %c0_12 = arith.constant 0 : index
    %c0_13 = arith.constant 0 : index
    %32 = vector.load %arg5[%c0_11, %c0_12, %c0_13] : memref<6x8x128xf32, #tpu.memory_space<vmem>>, vector<1x8x128xf32>
    %33 = vector.shape_cast %32 : vector<1x8x128xf32> to vector<8x128xf32>
    %34 = vector.shape_cast %31 : vector<8x128xf32> to vector<1x8x128xf32>
    tpu.vector_store %arg5[%c0_11, %c0_12, %c0_13], %34 {strides = array<i32>} : memref<6x8x128xf32, #tpu.memory_space<vmem>>, vector<1x8x128xf32>,
    %c1 = arith.constant 1 : index
    %c0_14 = arith.constant 0 : index
    %c0_15 = arith.constant 0 : index
    %35 = vector.load %arg5[%c1, %c0_14, %c0_15] : memref<6x8x128xf32, #tpu.memory_space<vmem>>, vector<1x8x128xf32>
    %36 = vector.shape_cast %35 : vector<1x8x128xf32> to vector<8x128xf32>
    %37 = vector.shape_cast %21 : vector<16x128xf32> to vector<2x8x128xf32>
    %cst_16 = arith.constant dense<0.000000e+00> : vector<8x128xf32>
    %38 = vector.multi_reduction <add>, %37, %cst_16 [0] : vector<2x8x128xf32> to vector<8x128xf32>
    %39 = arith.addf %36, %38 : vector<8x128xf32>
    %c1_17 = arith.constant 1 : index
    %c0_18 = arith.constant 0 : index
    %c0_19 = arith.constant 0 : index
    %40 = vector.load %arg5[%c1_17, %c0_18, %c0_19] : memref<6x8x128xf32, #tpu.memory_space<vmem>>, vector<1x8x128xf32>
    %41 = vector.shape_cast %40 : vector<1x8x128xf32> to vector<8x128xf32>
    %42 = vector.shape_cast %39 : vector<8x128xf32> to vector<1x8x128xf32>
    tpu.vector_store %arg5[%c1_17, %c0_18, %c0_19], %42 {strides = array<i32>} : memref<6x8x128xf32, #tpu.memory_space<vmem>>, vector<1x8x128xf32>,
    %c2 = arith.constant 2 : index
    %c0_20 = arith.constant 0 : index
    %c0_21 = arith.constant 0 : index
    %43 = vector.load %arg5[%c2, %c0_20, %c0_21] : memref<6x8x128xf32, #tpu.memory_space<vmem>>, vector<1x8x128xf32>
    %44 = vector.shape_cast %43 : vector<1x8x128xf32> to vector<8x128xf32>
    %45 = arith.mulf %8, %10 : vector<16x128xf32>
    %46 = vector.shape_cast %45 : vector<16x128xf32> to vector<2x8x128xf32>
    %cst_22 = arith.constant dense<0.000000e+00> : vector<8x128xf32>
    %47 = vector.multi_reduction <add>, %46, %cst_22 [0] : vector<2x8x128xf32> to vector<8x128xf32>
    %48 = arith.addf %44, %47 : vector<8x128xf32>
    %c2_23 = arith.constant 2 : index
    %c0_24 = arith.constant 0 : index
    %c0_25 = arith.constant 0 : index
    %49 = vector.load %arg5[%c2_23, %c0_24, %c0_25] : memref<6x8x128xf32, #tpu.memory_space<vmem>>, vector<1x8x128xf32>
    %50 = vector.shape_cast %49 : vector<1x8x128xf32> to vector<8x128xf32>
    %51 = vector.shape_cast %48 : vector<8x128xf32> to vector<1x8x128xf32>
    tpu.vector_store %arg5[%c2_23, %c0_24, %c0_25], %51 {strides = array<i32>} : memref<6x8x128xf32, #tpu.memory_space<vmem>>, vector<1x8x128xf32>,
    %c3 = arith.constant 3 : index
    %c0_26 = arith.constant 0 : index
    %c0_27 = arith.constant 0 : index
    %52 = vector.load %arg5[%c3, %c0_26, %c0_27] : memref<6x8x128xf32, #tpu.memory_space<vmem>>, vector<1x8x128xf32>
    %53 = vector.shape_cast %52 : vector<1x8x128xf32> to vector<8x128xf32>
    %54 = vector.shape_cast %8 : vector<16x128xf32> to vector<2x8x128xf32>
    %cst_28 = arith.constant dense<0.000000e+00> : vector<8x128xf32>
    %55 = vector.multi_reduction <add>, %54, %cst_28 [0] : vector<2x8x128xf32> to vector<8x128xf32>
    %56 = arith.addf %53, %55 : vector<8x128xf32>
    %c3_29 = arith.constant 3 : index
    %c0_30 = arith.constant 0 : index
    %c0_31 = arith.constant 0 : index
    %57 = vector.load %arg5[%c3_29, %c0_30, %c0_31] : memref<6x8x128xf32, #tpu.memory_space<vmem>>, vector<1x8x128xf32>
    %58 = vector.shape_cast %57 : vector<1x8x128xf32> to vector<8x128xf32>
    %59 = vector.shape_cast %56 : vector<8x128xf32> to vector<1x8x128xf32>
    tpu.vector_store %arg5[%c3_29, %c0_30, %c0_31], %59 {strides = array<i32>} : memref<6x8x128xf32, #tpu.memory_space<vmem>>, vector<1x8x128xf32>,
    %c4 = arith.constant 4 : index
    %c0_32 = arith.constant 0 : index
    %c0_33 = arith.constant 0 : index
    %60 = vector.load %arg5[%c4, %c0_32, %c0_33] : memref<6x8x128xf32, #tpu.memory_space<vmem>>, vector<1x8x128xf32>
    %61 = vector.shape_cast %60 : vector<1x8x128xf32> to vector<8x128xf32>
    %62 = vector.shape_cast %10 : vector<16x128xf32> to vector<2x8x128xf32>
    %cst_34 = arith.constant dense<0.000000e+00> : vector<8x128xf32>
    %63 = vector.multi_reduction <add>, %62, %cst_34 [0] : vector<2x8x128xf32> to vector<8x128xf32>
    %64 = arith.addf %61, %63 : vector<8x128xf32>
    %c4_35 = arith.constant 4 : index
    %c0_36 = arith.constant 0 : index
    %c0_37 = arith.constant 0 : index
    %65 = vector.load %arg5[%c4_35, %c0_36, %c0_37] : memref<6x8x128xf32, #tpu.memory_space<vmem>>, vector<1x8x128xf32>
    %66 = vector.shape_cast %65 : vector<1x8x128xf32> to vector<8x128xf32>
    %67 = vector.shape_cast %64 : vector<8x128xf32> to vector<1x8x128xf32>
    tpu.vector_store %arg5[%c4_35, %c0_36, %c0_37], %67 {strides = array<i32>} : memref<6x8x128xf32, #tpu.memory_space<vmem>>, vector<1x8x128xf32>,
    %c5 = arith.constant 5 : index
    %c0_38 = arith.constant 0 : index
    %c0_39 = arith.constant 0 : index
    %68 = vector.load %arg5[%c5, %c0_38, %c0_39] : memref<6x8x128xf32, #tpu.memory_space<vmem>>, vector<1x8x128xf32>
    %69 = vector.shape_cast %68 : vector<1x8x128xf32> to vector<8x128xf32>
    %70 = vector.shape_cast %25 : vector<16x128xf32> to vector<2x8x128xf32>
    %cst_40 = arith.constant dense<0.000000e+00> : vector<8x128xf32>
    %71 = vector.multi_reduction <add>, %70, %cst_40 [0] : vector<2x8x128xf32> to vector<8x128xf32>
    %72 = arith.addf %69, %71 : vector<8x128xf32>
    %c5_41 = arith.constant 5 : index
    %c0_42 = arith.constant 0 : index
    %c0_43 = arith.constant 0 : index
    %73 = vector.load %arg5[%c5_41, %c0_42, %c0_43] : memref<6x8x128xf32, #tpu.memory_space<vmem>>, vector<1x8x128xf32>
    %74 = vector.shape_cast %73 : vector<1x8x128xf32> to vector<8x128xf32>
    %75 = vector.shape_cast %72 : vector<8x128xf32> to vector<1x8x128xf32>
    tpu.vector_store %arg5[%c5_41, %c0_42, %c0_43], %75 {strides = array<i32>} : memref<6x8x128xf32, #tpu.memory_space<vmem>>, vector<1x8x128xf32>,
    %c0_44 = arith.constant 0 : index
    %c0_45 = arith.constant 0 : index
    %76 = vector.load %arg6[%c0_44, %c0_45] : memref<8x128xf32, #tpu.memory_space<vmem>>, vector<8x128xf32>
    %77 = vector.shape_cast %8 : vector<16x128xf32> to vector<2x8x128xf32>
    %cst_46 = arith.constant dense<0xFF800000> : vector<8x128xf32>
    %78 = vector.multi_reduction <maximumf>, %77, %cst_46 [0] : vector<2x8x128xf32> to vector<8x128xf32>
    %79 = arith.maximumf %76, %78 : vector<8x128xf32>
    %c0_47 = arith.constant 0 : index
    %c0_48 = arith.constant 0 : index
    %80 = vector.load %arg6[%c0_47, %c0_48] : memref<8x128xf32, #tpu.memory_space<vmem>>, vector<8x128xf32>
    tpu.vector_store %arg6[%c0_47, %c0_48], %79 {strides = array<i32>} : memref<8x128xf32, #tpu.memory_space<vmem>>, vector<8x128xf32>,
    %c1_i32_49 = arith.constant 1 : i32
    %c0_i32_50 = arith.constant 0 : i32
    %81 = arith.cmpi eq, %arg1, %c0_i32_50 : i32
    %82 = arith.extui %81 : i1 to i32
    %c0_i32_51 = arith.constant 0 : i32
    %83 = arith.cmpi ne, %82, %c0_i32_51 : i32
    scf.if %83 {
      %c0_52 = arith.constant 0 : index
      %c0_53 = arith.constant 0 : index
      %c0_54 = arith.constant 0 : index
      %84 = vector.load %arg5[%c0_52, %c0_53, %c0_54] : memref<6x8x128xf32, #tpu.memory_space<vmem>>, vector<6x8x128xf32>
      %c0_55 = arith.constant 0 : index
      %c0_56 = arith.constant 0 : index
      %c0_57 = arith.constant 0 : index
      %c0_58 = arith.constant 0 : index
      %85 = vector.load %arg4[%c0_55, %c0_56, %c0_57, %c0_58] : memref<1x7x8x128xf32, #tpu.memory_space<vmem>>, vector<1x6x8x128xf32>
      %86 = vector.shape_cast %85 : vector<1x6x8x128xf32> to vector<6x8x128xf32>
      %87 = vector.shape_cast %84 : vector<6x8x128xf32> to vector<1x6x8x128xf32>
      tpu.vector_store %arg4[%c0_55, %c0_56, %c0_57, %c0_58], %87 {strides = array<i32>} : memref<1x7x8x128xf32, #tpu.memory_space<vmem>>, vector<1x6x8x128xf32>,
      %c0_59 = arith.constant 0 : index
      %c0_60 = arith.constant 0 : index
      %88 = vector.load %arg6[%c0_59, %c0_60] : memref<8x128xf32, #tpu.memory_space<vmem>>, vector<8x128xf32>
      %c0_61 = arith.constant 0 : index
      %c6 = arith.constant 6 : index
      %c0_62 = arith.constant 0 : index
      %c0_63 = arith.constant 0 : index
      %89 = vector.load %arg4[%c0_61, %c6, %c0_62, %c0_63] : memref<1x7x8x128xf32, #tpu.memory_space<vmem>>, vector<1x1x8x128xf32>
      %90 = vector.shape_cast %89 : vector<1x1x8x128xf32> to vector<8x128xf32>
      %91 = vector.shape_cast %88 : vector<8x128xf32> to vector<1x1x8x128xf32>
      tpu.vector_store %arg4[%c0_61, %c6, %c0_62, %c0_63], %91 {strides = array<i32>} : memref<1x7x8x128xf32, #tpu.memory_space<vmem>>, vector<1x1x8x128xf32>,
    } else {
    }
    return
  }
  func.func @transform_0(%arg0: i32, %arg1: i32) -> (i32, i32) {
    %c1_i32 = arith.constant 1 : i32
    %0 = arith.muli %arg0, %c1_i32 : i32
    %1 = arith.addi %0, %arg1 : i32
    %c0_i32 = arith.constant 0 : i32
    %c0_i32_0 = arith.constant 0 : i32
    return %1, %c0_i32 : i32, i32
  }
  func.func @transform_1(%arg0: i32, %arg1: i32) -> (i32, i32) {
    %c1_i32 = arith.constant 1 : i32
    %0 = arith.muli %arg0, %c1_i32 : i32
    %1 = arith.addi %0, %arg1 : i32
    %c0_i32 = arith.constant 0 : i32
    %c0_i32_0 = arith.constant 0 : i32
    return %1, %c0_i32 : i32, i32
  }
  func.func @transform_2(%arg0: i32, %arg1: i32) -> (i32, i32, i32, i32) {
    %c0_i32 = arith.constant 0 : i32
    %c0_i32_0 = arith.constant 0 : i32
    %c0_i32_1 = arith.constant 0 : i32
    %c0_i32_2 = arith.constant 0 : i32
    return %arg0, %c0_i32, %c0_i32_0, %c0_i32_1 : i32, i32, i32, i32
  }
}

</mosaic_0001>

<llo_original>
// kernel: tpu_custom_call.1
$region0: #{tpu_custom_call.1}
  #allocation0 [shape = 'u32[]', space=smem, size = 0x4, offset = 0x4, fixed_abs, tag = 'smem constant byte address 0x4 - core index']
  #allocation1 [shape = 'u32[144,128]{1,0:T(1,128)}', space=vmem, size = 0x12000, scoped, tag = 'internal scratch']
  #allocation2 [shape = 'f32[6,8,128]{2,1,0:T(8,128)}', space=vmem, size = 0x6000, scoped, tag = 'scratch operand']
  #allocation3 [shape = 'f32[8,128]{1,0:T(8,128)}', space=vmem, size = 0x1000, scoped, tag = 'scratch operand']
  %s0 = inlined_call_operand.hbm [shape: f32[16,128], index: 0, kind: input, shape index: {}]
  %s1 = inlined_call_operand.hbm [shape: f32[16,128], index: 1, kind: input, shape index: {}]
  %s2 = inlined_call_operand.hbm [shape: f32[1,7,8,128], index: 2, kind: output, shape index: {}]
  %s3 = sld [smem:[#allocation0]]
  $region34: #{tpu_custom_call.1} parent=0
    _
  %s5 = ssub.s32 1, %s3
  %s6 = scalar_select 0, %s5, %s3
  $region1: #{tpu_custom_call.1} parent=0
    #allocation4 [shape = 'u8[8192]{0}', space=vmem, size = 0x2000, scoped, tag = 'input window, operand 0, single buffered']
    #allocation5 [shape = 's32[1]{0}', space=sflag, size = 0x4, scoped, tag = 'scoped memory for tpu_custom_call.1']
    #allocation6 [shape = 's32[1]{0}', space=sflag, size = 0x4, scoped, tag = 'scoped memory for tpu_custom_call.1']
    #allocation7 [shape = 'u8[8192]{0}', space=vmem, size = 0x2000, scoped, tag = 'input window, operand 1, single buffered']
    #allocation8 [shape = 's32[1]{0}', space=sflag, size = 0x4, scoped, tag = 'scoped memory for tpu_custom_call.1']
    #allocation9 [shape = 'u8[28672]{0}', space=vmem, size = 0x7000, scoped, tag = 'output window, operand 0, single buffered']
    %7 = vsyncpa [#allocation5], 0
    %8 = vsyncpa [#allocation8], 0
    %9 = vsyncpa [#allocation6], 0
    // Predicated region
    $region2: #{tpu_custom_call.1} parent=1 // pred_check
      _
    $region3: #{tpu_custom_call.1} parent=1 // pred_check_branch
      %11 = sbr.rel (0) target = $region5
    $region4: #{tpu_custom_call.1} parent=1 // pred_region
      %s12 = sadd.s32 0, 0
      %s13 = smul.u32 2, %s12
      %s15 = ssub.s32 256, 256
      %16 = vsyncadd [#allocation5], %s15
      %s17 = smul.addr %s13, 128
      %s18 = scalar_lea.hbm %s0, %s17
      %s19 = sshll.u32 [#allocation4], 4
      %s20 = int_to_ptr.vmem [resolvable:$true] %s19
      %25 = dma.hbm_to_vmem [thread:$0]  %s18, 256, %s20, [#allocation5], 128, 128, 8
    $region5: #{tpu_custom_call.1} parent=1 // pred_fallthru
      _
    // Predicated region
    $region6: #{tpu_custom_call.1} parent=1 // pred_check
      _
    $region7: #{tpu_custom_call.1} parent=1 // pred_check_branch
      %27 = sbr.rel (0) target = $region9
    $region8: #{tpu_custom_call.1} parent=1 // pred_region
      %s28 = sadd.s32 0, 0
      %s29 = smul.u32 2, %s28
      %s31 = ssub.s32 256, 256
      %32 = vsyncadd [#allocation8], %s31
      %s33 = smul.addr %s29, 128
      %s34 = scalar_lea.hbm %s1, %s33
      %s35 = sshll.u32 [#allocation7], 4
      %s36 = int_to_ptr.vmem [resolvable:$true] %s35
      %41 = dma.hbm_to_vmem [thread:$0]  %s34, 256, %s36, [#allocation8], 128, 128, 8
    $region9: #{tpu_custom_call.1} parent=1 // pred_fallthru
      _
    // Predicated region
    $region10: #{tpu_custom_call.1} parent=1 // pred_check
      _
    $region11: #{tpu_custom_call.1} parent=1 // pred_check_branch
      %43 = sbr.rel (0) target = $region13
    $region12: #{tpu_custom_call.1} parent=1 // pred_region
      %44 = dma.done [#allocation5], 256
    $region13: #{tpu_custom_call.1} parent=1 // pred_fallthru
      _
    // Predicated region
    $region14: #{tpu_custom_call.1} parent=1 // pred_check
      _
    $region15: #{tpu_custom_call.1} parent=1 // pred_check_branch
      %46 = sbr.rel (0) target = $region17
    $region16: #{tpu_custom_call.1} parent=1 // pred_region
      %47 = dma.done [#allocation8], 256
    $region17: #{tpu_custom_call.1} parent=1 // pred_fallthru
      _
    %s48 = sadd.s32 0, 0
    %s49 = smul.u32 2, %s48
    %s50 = sadd.s32 0, 0
    %s51 = smul.u32 2, %s50
    %p52 = scmp.eq.s32.totalorder 0, 0
    // Predicated region
    $region18: #{tpu_custom_call.1} parent=1 // pred_check
      %p53 = pneg %p52
    $region19: #{tpu_custom_call.1} parent=1 // pred_check_branch
      %55 = sbr.rel (%p53) target = $region21
    $region20: #{tpu_custom_call.1} parent=1 // pred_region
      %56 = vst [vmem:[#allocation2] sm:$0xff] 0.0
      %57 = vst [vmem:[#allocation2 + $0x8] sm:$0xff] 0.0
      %58 = vst [vmem:[#allocation2 + $0x10] sm:$0xff] 0.0
      %59 = vst [vmem:[#allocation2 + $0x18] sm:$0xff] 0.0
      %60 = vst [vmem:[#allocation2 + $0x20] sm:$0xff] 0.0
      %61 = vst [vmem:[#allocation2 + $0x28] sm:$0xff] 0.0
      %62 = vst [vmem:[#allocation3] sm:$0xff] -inf
    $region21: #{tpu_custom_call.1} parent=1 // pred_fallthru
      _
    %v63 = vld [vmem:[#allocation4] sm:$0xff]
    %v64 = vld [vmem:[#allocation4 + $0x8] sm:$0xff]
    %v65 = vld [vmem:[#allocation7] sm:$0xff]
    %v66 = vld [vmem:[#allocation7 + $0x8] sm:$0xff]
    %v67 = vand.u32 2147483647, %v63
    %v68 = vand.u32 2147483647, %v64
    %v69 = vsub.f32 0.0, %v67
    %v70 = vsub.f32 0.0, %v68
    %v71 = vmul.f32 %v69, 1.442695
    %v72 = vpow.pop %v71
    %v73 = vmul.f32 %v70, 1.442695
    %v74 = vpow.pop %v73
    %v75 = vadd.f32 %v72, 1.0
    %v76 = vadd.f32 %v74, 1.0
    %v77 = vrcp.pop %v75
    %v78 = vrcp.pop %v76
    %vm79 = vcmp.ge.f32.partialorder %v63, 0.0
    %vm80 = vcmp.ge.f32.partialorder %v64, 0.0
    %v81 = vmul.f32 %v72, %v77
    %v82 = vmul.f32 %v74, %v78
    %v83 = vsel %vm79, %v77, %v81
    %v84 = vsel %vm80, %v78, %v82
    %v85 = vmax.f32 %v63, 0.0
    %v86 = vmax.f32 %v64, 0.0
    %v87 = vadd.f32 %v72, 1.0
    %v88 = vlog2.pop %v87
    %v89 = vmul.f32 %v88, 0.6931472
    %v90 = vmul.f32 -0.5, %v72
    %v91 = vadd.f32 %v90, 1.0
    %v92 = vmul.f32 %v91, %v72
    %v93 = vand.u32 2147483647, %v72
    %vm94 = vcmp.lt.f32.partialorder %v93, 0.0004427343
    %v95 = vsel %vm94, %v92, %v89
    %v96 = vadd.f32 %v74, 1.0
    %v97 = vlog2.pop %v96
    %v98 = vmul.f32 %v97, 0.6931472
    %v99 = vmul.f32 -0.5, %v74
    %v100 = vadd.f32 %v99, 1.0
    %v101 = vmul.f32 %v100, %v74
    %v102 = vand.u32 2147483647, %v74
    %vm103 = vcmp.lt.f32.partialorder %v102, 0.0004427343
    %v104 = vsel %vm103, %v101, %v98
    %v105 = vadd.f32 %v85, %v95
    %v106 = vadd.f32 %v86, %v104
    %v107 = vld [vmem:[#allocation2] sm:$0xff]
    %v108 = vmul.f32 %v83, %v65
    %v109 = vmul.f32 %v84, %v66
    %v110 = vadd.f32 %v108, %v109
    %v111 = vadd.f32 %v107, %v110
    %112 = vst [vmem:[#allocation2] sm:$0xff] %v111
    %s113 = scalar_lea.vmem [#allocation2], 8
    %v114 = vld [vmem:[%s113] sm:$0xff]
    %v115 = vadd.f32 %v83, %v84
    %v116 = vadd.f32 %v114, %v115
    %117 = vst [vmem:[%s113] sm:$0xff] %v116
    %s118 = scalar_lea.vmem [#allocation2], 16
    %v119 = vld [vmem:[%s118] sm:$0xff]
    %v120 = vmul.f32 %v63, %v65
    %v121 = vmul.f32 %v64, %v66
    %v122 = vadd.f32 %v120, %v121
    %v123 = vadd.f32 %v119, %v122
    %124 = vst [vmem:[%s118] sm:$0xff] %v123
    %s125 = scalar_lea.vmem [#allocation2], 24
    %v126 = vld [vmem:[%s125] sm:$0xff]
    %v127 = vadd.f32 %v63, %v64
    %v128 = vadd.f32 %v126, %v127
    %129 = vst [vmem:[%s125] sm:$0xff] %v128
    %s130 = scalar_lea.vmem [#allocation2], 32
    %v131 = vld [vmem:[%s130] sm:$0xff]
    %v132 = vadd.f32 %v65, %v66
    %v133 = vadd.f32 %v131, %v132
    %134 = vst [vmem:[%s130] sm:$0xff] %v133
    %s135 = scalar_lea.vmem [#allocation2], 40
    %v136 = vld [vmem:[%s135] sm:$0xff]
    %v137 = vadd.f32 %v105, %v106
    %v138 = vadd.f32 %v136, %v137
    %139 = vst [vmem:[%s135] sm:$0xff] %v138
    %v140 = vld [vmem:[#allocation3] sm:$0xff]
    %v141 = vmax.f32 %v63, %v64
    %v142 = vmax.f32 %v140, %v141
    %143 = vst [vmem:[#allocation3] sm:$0xff] %v142
    // Predicated region
    $region22: #{tpu_custom_call.1} parent=1 // pred_check
      %p144 = pneg %p52
    $region23: #{tpu_custom_call.1} parent=1 // pred_check_branch
      %146 = sbr.rel (%p144) target = $region25
    $region24: #{tpu_custom_call.1} parent=1 // pred_region
      %v147 = vld [vmem:[#allocation2] sm:$0xff]
      %v148 = vld [vmem:[#allocation2 + $0x8] sm:$0xff]
      %v149 = vld [vmem:[#allocation2 + $0x10] sm:$0xff]
      %v150 = vld [vmem:[#allocation2 + $0x18] sm:$0xff]
      %v151 = vld [vmem:[#allocation2 + $0x20] sm:$0xff]
      %v152 = vld [vmem:[#allocation2 + $0x28] sm:$0xff]
      %153 = vst [vmem:[#allocation9] sm:$0xff] %v147
      %154 = vst [vmem:[#allocation9 + $0x8] sm:$0xff] %v148
      %155 = vst [vmem:[#allocation9 + $0x10] sm:$0xff] %v149
      %156 = vst [vmem:[#allocation9 + $0x18] sm:$0xff] %v150
      %157 = vst [vmem:[#allocation9 + $0x20] sm:$0xff] %v151
      %158 = vst [vmem:[#allocation9 + $0x28] sm:$0xff] %v152
      %v159 = vld [vmem:[#allocation3] sm:$0xff]
      %s160 = scalar_lea.vmem [#allocation9], 48
      %161 = vst [vmem:[%s160] sm:$0xff] %v159
    $region25: #{tpu_custom_call.1} parent=1 // pred_fallthru
      _
    // Predicated region
    $region26: #{tpu_custom_call.1} parent=1 // pred_check
      _
    $region27: #{tpu_custom_call.1} parent=1 // pred_check_branch
      %163 = sbr.rel (0) target = $region29
    $region28: #{tpu_custom_call.1} parent=1 // pred_region
      %s165 = ssub.s32 896, 896
      %166 = vsyncadd [#allocation6], %s165
      %s167 = sshll.u32 [#allocation9], 4
      %s168 = int_to_ptr.vmem [resolvable:$true] %s167
      %173 = dma.vmem_to_hbm [thread:$0]  %s168, 896, %s2, [#allocation6], 128, 128, 8
    $region29: #{tpu_custom_call.1} parent=1 // pred_fallthru
      _
    // Predicated region
    $region30: #{tpu_custom_call.1} parent=1 // pred_check
      _
    $region31: #{tpu_custom_call.1} parent=1 // pred_check_branch
      %175 = sbr.rel (0) target = $region33
    $region32: #{tpu_custom_call.1} parent=1 // pred_region
      %176 = dma.done [#allocation6], 896
    $region33: #{tpu_custom_call.1} parent=1 // pred_fallthru
      _
    %177 = vsyncpa [#allocation5], 1
    %178 = vsyncpa [#allocation8], 1
    %179 = vsyncpa [#allocation6], 1

</llo_original>
